<compile_context>
chip_gen: v5e
topology: v5e:2x2
jax: 0.10.0
libtpu: 0.0.40
codegen_flags: <defaults>
</compile_context>

<pallas_src>
import jax
import jax.numpy as jnp
from jax.experimental import pallas as pl
from jax.experimental.pallas import tpu as pltpu


def _camera_kernel(pose_ref, uvd_ref, out_ref):
    # pose_ref: SMEM (16,) f32   row-major flattened 4x4 pose (scalar prefetch)
    # uvd_ref:  VMEM (3, S, 128) f32   [u, v, depth] slabs (channel-major)
    # out_ref:  VMEM (3, S, 128) f32   world [x, y, z] slabs
    u = uvd_ref[0]
    v = uvd_ref[1]
    d = uvd_ref[2]
    # world[..., j] = u*P[j,0] + v*P[j,1] + d*P[j,2] + 1*P[j,3]
    for j in range(3):
        out_ref[j] = (pose_ref[4 * j + 0] * u
                      + pose_ref[4 * j + 1] * v
                      + pose_ref[4 * j + 2] * d
                      + pose_ref[4 * j + 3])


def _choose_sublane_tile(nrow: int) -> int:
    """Rows-of-128-lanes processed per grid step.

    * Small inputs (< 256 rows ~= 32K points): single grid step — per-step
      pipeline overhead (~0.35 us) would exceed the whole HBM time, and on
      single-TC v5e/v6e a split buys nothing.
    * Large inputs: cap the tile at 512 rows (~85% of HBM roofline already) and
      size for >= 4 grid steps, i.e. >= 2 pipelined steps per TensorCore when
      the "parallel" axis is sharded across v7x's two TCs.
    """
    if nrow < 256:
        return nrow                               # block dim == full array dim (always legal)
    quarter = ((pl.cdiv(nrow, 4) + 7) // 8) * 8   # >= 4 steps, multiple of 8 sublanes
    return min(512, quarter)


def orthogonal_camera_forward(uv, depth, pose):
    """uv: (B, N, 2), depth: (B, N, 1), pose: (4, 4)  ->  world: (B, N, 3)."""
    assert depth.shape[-1] == 1
    B, N, _ = uv.shape
    P = B * N
    nrow = pl.cdiv(P, 128)
    Ppad = nrow * 128
    pad = Ppad - P                                # <= 127 lanes of padding, never a full tile

    out_dtype = jnp.result_type(uv.dtype, depth.dtype, pose.dtype)

    # decode_pose() is the identity on its input; just flatten for SMEM prefetch.
    # TODO(synk): if decode_pose ever becomes a real (quaternion/6D) decoding,
    # apply it here before flattening.
    pose_flat = pose.astype(jnp.float32).reshape(16)

    # Single channel-major staging pass (one concat + one pad + one transpose).
    uvd = jnp.concatenate([uv, depth], axis=-1).astype(jnp.float32).reshape(P, 3)
    uvd_t = jnp.pad(uvd, ((0, pad), (0, 0))).T.reshape(3, nrow, 128)

    S = _choose_sublane_tile(nrow)
    grid = (pl.cdiv(nrow, S),)

    out_t = pl.pallas_call(
        _camera_kernel,
        out_shape=jax.ShapeDtypeStruct((3, nrow, 128), jnp.float32),
        grid_spec=pltpu.PrefetchScalarGridSpec(
            num_scalar_prefetch=1,                # pose_flat -> SMEM, staged once
            grid=grid,
            in_specs=[pl.BlockSpec((3, S, 128), lambda i, _pose: (0, i, 0))],
            out_specs=pl.BlockSpec((3, S, 128), lambda i, _pose: (0, i, 0)),
        ),
        compiler_params=pltpu.CompilerParams(
            # TODO(synk): verify in xprof that "parallel" really shards this axis
            # across v7x's two TensorCores; if not, switch to pltpu.CORE_PARALLEL
            # (or pl.core_map over a tensorcore mesh) with an explicit row split.
            dimension_semantics=("parallel",),
            vmem_limit_bytes=32 * 1024 * 1024,    # ~3 MiB double-buffered footprint @ S=512
        ),
        cost_estimate=pl.CostEstimate(
            flops=18 * Ppad,                      # 3 channels x (3 mul + 3 add) per point
            transcendentals=0,
            bytes_accessed=24 * Ppad,             # 12 B in + 12 B out per point (f32)
        ),
    )(pose_flat, uvd_t)

    # TODO(synk): fold this transpose into the consumer of `world` (or keep the
    # pipeline channel-major) — it is a full extra HBM pass.
    world = out_t.reshape(3, Ppad)[:, :P].T.reshape(B, N, 3)
    # TODO(synk): if producer/consumer tolerate bf16, switch kernel I/O to bf16
    # (12 B/point) while keeping f32 math inside the kernel.
    return world.astype(out_dtype)


def _reference_forward(uv, depth, pose):
    # Pure-JAX transcription of the PyTorch forward (decode_pose is identity).
    uvd = jnp.concatenate([uv, depth], axis=-1)
    decoded_pose = pose[None, ...]                       # unsqueeze(-3): (1, 4, 4)
    uvd1 = jnp.concatenate([uvd, jnp.ones_like(depth)], axis=-1)
    world = jnp.matmul(uvd1, jnp.swapaxes(decoded_pose, -1, -2))
    return world[..., :3]


if __name__ == "__main__":
    key = jax.random.PRNGKey(0)
    k_uv, k_d, k_p = jax.random.split(key, 3)

    B, N = 2, 256
    uv = jax.random.normal(k_uv, (B, N, 2), dtype=jnp.float32)
    depth = jax.random.uniform(k_d, (B, N, 1), dtype=jnp.float32)
    pose = jax.random.normal(k_p, (4, 4), dtype=jnp.float32)

    world = orthogonal_camera_forward(uv, depth, pose)
    jax.block_until_ready(world)

    ref = _reference_forward(uv, depth, pose)
    assert world.shape == (B, N, 3) and world.dtype == ref.dtype
    assert jnp.allclose(world, ref, atol=1e-5, rtol=1e-5), "mismatch vs reference"

    print("KERNEL_OK")
</pallas_src>

<mosaic_0001>
module attributes {stable_mosaic.version = 11 : i64} {
  func.func @_camera_kernel(%arg0: i32, %arg1: memref<16xf32, #tpu.memory_space<smem>>, %arg2: memref<3x4x128xf32, #tpu.memory_space<vmem>>, %arg3: memref<3x4x128xf32, #tpu.memory_space<vmem>>) attributes {dimension_semantics = [#tpu.dimension_semantics<parallel>], iteration_bounds = array<i64: 1>, scalar_prefetch = 1 : i64, scratch_operands = 0 : i64, tpu.core_type = #tpu.core_type<tc>, window_params = [{transform_indices = @transform_0, window_bounds = array<i64: 3, 4, 128>}, {transform_indices = @transform_1, window_bounds = array<i64: 3, 4, 128>}]} {
    %c0 = arith.constant 0 : index
    %c0_0 = arith.constant 0 : index
    %c0_1 = arith.constant 0 : index
    %0 = vector.load %arg2[%c0, %c0_0, %c0_1] : memref<3x4x128xf32, #tpu.memory_space<vmem>>, vector<1x4x128xf32>
    %1 = vector.shape_cast %0 : vector<1x4x128xf32> to vector<4x128xf32>
    %c1 = arith.constant 1 : index
    %c0_2 = arith.constant 0 : index
    %c0_3 = arith.constant 0 : index
    %2 = vector.load %arg2[%c1, %c0_2, %c0_3] : memref<3x4x128xf32, #tpu.memory_space<vmem>>, vector<1x4x128xf32>
    %3 = vector.shape_cast %2 : vector<1x4x128xf32> to vector<4x128xf32>
    %c2 = arith.constant 2 : index
    %c0_4 = arith.constant 0 : index
    %c0_5 = arith.constant 0 : index
    %4 = vector.load %arg2[%c2, %c0_4, %c0_5] : memref<3x4x128xf32, #tpu.memory_space<vmem>>, vector<1x4x128xf32>
    %5 = vector.shape_cast %4 : vector<1x4x128xf32> to vector<4x128xf32>
    %c0_6 = arith.constant 0 : index
    %6 = memref.load %arg1[%c0_6] : memref<16xf32, #tpu.memory_space<smem>>
    %7 = vector.broadcast %6 : f32 to vector<4x128xf32>
    %8 = arith.mulf %7, %1 : vector<4x128xf32>
    %c1_7 = arith.constant 1 : index
    %9 = memref.load %arg1[%c1_7] : memref<16xf32, #tpu.memory_space<smem>>
    %10 = vector.broadcast %9 : f32 to vector<4x128xf32>
    %11 = arith.mulf %10, %3 : vector<4x128xf32>
    %12 = arith.addf %8, %11 : vector<4x128xf32>
    %c2_8 = arith.constant 2 : index
    %13 = memref.load %arg1[%c2_8] : memref<16xf32, #tpu.memory_space<smem>>
    %14 = vector.broadcast %13 : f32 to vector<4x128xf32>
    %15 = arith.mulf %14, %5 : vector<4x128xf32>
    %16 = arith.addf %12, %15 : vector<4x128xf32>
    %c3 = arith.constant 3 : index
    %17 = memref.load %arg1[%c3] : memref<16xf32, #tpu.memory_space<smem>>
    %18 = vector.broadcast %17 : f32 to vector<4x128xf32>
    %19 = arith.addf %16, %18 : vector<4x128xf32>
    %c0_9 = arith.constant 0 : index
    %c0_10 = arith.constant 0 : index
    %c0_11 = arith.constant 0 : index
    %20 = vector.load %arg3[%c0_9, %c0_10, %c0_11] : memref<3x4x128xf32, #tpu.memory_space<vmem>>, vector<1x4x128xf32>
    %21 = vector.shape_cast %20 : vector<1x4x128xf32> to vector<4x128xf32>
    %22 = vector.shape_cast %19 : vector<4x128xf32> to vector<1x4x128xf32>
    tpu.vector_store %arg3[%c0_9, %c0_10, %c0_11], %22 {strides = array<i32>} : memref<3x4x128xf32, #tpu.memory_space<vmem>>, vector<1x4x128xf32>,
    %c4 = arith.constant 4 : index
    %23 = memref.load %arg1[%c4] : memref<16xf32, #tpu.memory_space<smem>>
    %24 = vector.broadcast %23 : f32 to vector<4x128xf32>
    %25 = arith.mulf %24, %1 : vector<4x128xf32>
    %c5 = arith.constant 5 : index
    %26 = memref.load %arg1[%c5] : memref<16xf32, #tpu.memory_space<smem>>
    %27 = vector.broadcast %26 : f32 to vector<4x128xf32>
    %28 = arith.mulf %27, %3 : vector<4x128xf32>
    %29 = arith.addf %25, %28 : vector<4x128xf32>
    %c6 = arith.constant 6 : index
    %30 = memref.load %arg1[%c6] : memref<16xf32, #tpu.memory_space<smem>>
    %31 = vector.broadcast %30 : f32 to vector<4x128xf32>
    %32 = arith.mulf %31, %5 : vector<4x128xf32>
    %33 = arith.addf %29, %32 : vector<4x128xf32>
    %c7 = arith.constant 7 : index
    %34 = memref.load %arg1[%c7] : memref<16xf32, #tpu.memory_space<smem>>
    %35 = vector.broadcast %34 : f32 to vector<4x128xf32>
    %36 = arith.addf %33, %35 : vector<4x128xf32>
    %c1_12 = arith.constant 1 : index
    %c0_13 = arith.constant 0 : index
    %c0_14 = arith.constant 0 : index
    %37 = vector.load %arg3[%c1_12, %c0_13, %c0_14] : memref<3x4x128xf32, #tpu.memory_space<vmem>>, vector<1x4x128xf32>
    %38 = vector.shape_cast %37 : vector<1x4x128xf32> to vector<4x128xf32>
    %39 = vector.shape_cast %36 : vector<4x128xf32> to vector<1x4x128xf32>
    tpu.vector_store %arg3[%c1_12, %c0_13, %c0_14], %39 {strides = array<i32>} : memref<3x4x128xf32, #tpu.memory_space<vmem>>, vector<1x4x128xf32>,
    %c8 = arith.constant 8 : index
    %40 = memref.load %arg1[%c8] : memref<16xf32, #tpu.memory_space<smem>>
    %41 = vector.broadcast %40 : f32 to vector<4x128xf32>
    %42 = arith.mulf %41, %1 : vector<4x128xf32>
    %c9 = arith.constant 9 : index
    %43 = memref.load %arg1[%c9] : memref<16xf32, #tpu.memory_space<smem>>
    %44 = vector.broadcast %43 : f32 to vector<4x128xf32>
    %45 = arith.mulf %44, %3 : vector<4x128xf32>
    %46 = arith.addf %42, %45 : vector<4x128xf32>
    %c10 = arith.constant 10 : index
    %47 = memref.load %arg1[%c10] : memref<16xf32, #tpu.memory_space<smem>>
    %48 = vector.broadcast %47 : f32 to vector<4x128xf32>
    %49 = arith.mulf %48, %5 : vector<4x128xf32>
    %50 = arith.addf %46, %49 : vector<4x128xf32>
    %c11 = arith.constant 11 : index
    %51 = memref.load %arg1[%c11] : memref<16xf32, #tpu.memory_space<smem>>
    %52 = vector.broadcast %51 : f32 to vector<4x128xf32>
    %53 = arith.addf %50, %52 : vector<4x128xf32>
    %c2_15 = arith.constant 2 : index
    %c0_16 = arith.constant 0 : index
    %c0_17 = arith.constant 0 : index
    %54 = vector.load %arg3[%c2_15, %c0_16, %c0_17] : memref<3x4x128xf32, #tpu.memory_space<vmem>>, vector<1x4x128xf32>
    %55 = vector.shape_cast %54 : vector<1x4x128xf32> to vector<4x128xf32>
    %56 = vector.shape_cast %53 : vector<4x128xf32> to vector<1x4x128xf32>
    tpu.vector_store %arg3[%c2_15, %c0_16, %c0_17], %56 {strides = array<i32>} : memref<3x4x128xf32, #tpu.memory_space<vmem>>, vector<1x4x128xf32>,
    return
  }
  func.func @transform_0(%arg0: i32, %arg1: memref<16xf32, #tpu.memory_space<smem>>) -> (i32, i32, i32) {
    %c0_i32 = arith.constant 0 : i32
    %c0_i32_0 = arith.constant 0 : i32
    %c0_i32_1 = arith.constant 0 : i32
    return %c0_i32, %arg0, %c0_i32_0 : i32, i32, i32
  }
  func.func @transform_1(%arg0: i32, %arg1: memref<16xf32, #tpu.memory_space<smem>>) -> (i32, i32, i32) {
    %c0_i32 = arith.constant 0 : i32
    %c0_i32_0 = arith.constant 0 : i32
    %c0_i32_1 = arith.constant 0 : i32
    return %c0_i32, %arg0, %c0_i32_0 : i32, i32, i32
  }
}

</mosaic_0001>

<llo_original>
// kernel: tpu_custom_call.1
$region0: #{tpu_custom_call.1}
  #allocation0 [shape = 'u32[]', space=smem, size = 0x4, offset = 0x4, fixed_abs, tag = 'smem constant byte address 0x4 - core index']
  #allocation1 [shape = 'u32[72,128]{1,0:T(1,128)}', space=vmem, size = 0x9000, scoped, tag = 'internal scratch']
  #allocation2 [shape = 's32[1]{0}', space=sflag, size = 0x4, scoped, tag = 'scoped memory for tpu_custom_call.1']
  #allocation3 [shape = 'u8[512]{0}', space=smem, size = 0x200, scoped, tag = 'prefetched SMEM operand 0']
  %s0 = inlined_call_operand.hbm [shape: f32[16], index: 0, kind: input, shape index: {}]
  %s1 = inlined_call_operand.hbm [shape: f32[3,4,128], index: 1, kind: input, shape index: {}]
  %s2 = inlined_call_operand.hbm [shape: f32[3,4,128], index: 2, kind: output, shape index: {}]
  %s3 = sld [smem:[#allocation0]]
  $region18: #{tpu_custom_call.1} parent=0
    _
  %s5 = ssub.s32 1, %s3
  %s6 = scalar_select 0, %s5, %s3
  %s8 = sshll.u32 %s0, 4
  %s9 = int_to_ptr.hbm [resolvable:$true] %s8
  %11 = dma.hbm_to_smem %s9, 16, [#allocation3], [#allocation2]
  %13 = dma.done [#allocation2], 16
  %14 = sfence
  $region1: #{tpu_custom_call.1} parent=0
    #allocation4 [shape = 'u8[6144]{0}', space=vmem, size = 0x1800, scoped, tag = 'input window, operand 1, single buffered']
    #allocation5 [shape = 's32[1]{0}', space=sflag, size = 0x4, scoped, tag = 'scoped memory for tpu_custom_call.1']
    #allocation6 [shape = 's32[1]{0}', space=sflag, size = 0x4, scoped, tag = 'scoped memory for tpu_custom_call.1']
    #allocation7 [shape = 'u8[6144]{0}', space=vmem, size = 0x1800, scoped, tag = 'output window, operand 0, single buffered']
    %15 = vsyncpa [#allocation5], 0
    %16 = vsyncpa [#allocation6], 0
    // Predicated region
    $region2: #{tpu_custom_call.1} parent=1 // pred_check
      _
    $region3: #{tpu_custom_call.1} parent=1 // pred_check_branch
      %18 = sbr.rel (0) target = $region5
    $region4: #{tpu_custom_call.1} parent=1 // pred_region
      %20 = vsyncadd [#allocation5], 0
      %s21 = sshll.u32 %s1, 4
      %s22 = int_to_ptr.hbm [resolvable:$true] %s21
      %s23 = sshll.u32 [#allocation4], 4
      %s24 = int_to_ptr.vmem [resolvable:$true] %s23
      %29 = dma.hbm_to_vmem [thread:$0]  %s22, 192, %s24, [#allocation5], 64, 64, 4
    $region5: #{tpu_custom_call.1} parent=1 // pred_fallthru
      _
    // Predicated region
    $region6: #{tpu_custom_call.1} parent=1 // pred_check
      _
    $region7: #{tpu_custom_call.1} parent=1 // pred_check_branch
      %31 = sbr.rel (0) target = $region9
    $region8: #{tpu_custom_call.1} parent=1 // pred_region
      %33 = dma.done [#allocation5], 192
    $region9: #{tpu_custom_call.1} parent=1 // pred_fallthru
      _
    %v34 = vld [vmem:[#allocation4] sm:$0xf]
    %s35 = scalar_lea.vmem [#allocation4], 4
    %v36 = vld [vmem:[%s35] sm:$0xf]
    %s37 = scalar_lea.vmem [#allocation4], 8
    %v38 = vld [vmem:[%s37] sm:$0xf]
    %s39 = sld [smem:[#allocation3]]
    %v40 = vstv %s39
    %v41 = vmul.f32 %v40, %v34
    %s42 = sld [smem:[#allocation3 + $0x1]]
    %v43 = vstv %s42
    %v44 = vmul.f32 %v43, %v36
    %v45 = vadd.f32 %v41, %v44
    %s46 = sld [smem:[#allocation3 + $0x2]]
    %v47 = vstv %s46
    %v48 = vmul.f32 %v47, %v38
    %v49 = vadd.f32 %v45, %v48
    %s50 = sld [smem:[#allocation3 + $0x3]]
    %v51 = vstv %s50
    %v52 = vadd.f32 %v49, %v51
    %53 = vst [vmem:[#allocation7] sm:$0xf] %v52
    %s54 = sld [smem:[#allocation3 + $0x4]]
    %v55 = vstv %s54
    %v56 = vmul.f32 %v55, %v34
    %s57 = sld [smem:[#allocation3 + $0x5]]
    %v58 = vstv %s57
    %v59 = vmul.f32 %v58, %v36
    %v60 = vadd.f32 %v56, %v59
    %s61 = sld [smem:[#allocation3 + $0x6]]
    %v62 = vstv %s61
    %v63 = vmul.f32 %v62, %v38
    %v64 = vadd.f32 %v60, %v63
    %s65 = sld [smem:[#allocation3 + $0x7]]
    %v66 = vstv %s65
    %v67 = vadd.f32 %v64, %v66
    %s68 = scalar_lea.vmem [#allocation7], 4
    %69 = vst [vmem:[%s68] sm:$0xf] %v67
    %s70 = sld [smem:[#allocation3 + $0x8]]
    %v71 = vstv %s70
    %v72 = vmul.f32 %v71, %v34
    %s73 = sld [smem:[#allocation3 + $0x9]]
    %v74 = vstv %s73
    %v75 = vmul.f32 %v74, %v36
    %v76 = vadd.f32 %v72, %v75
    %s77 = sld [smem:[#allocation3 + $0xa]]
    %v78 = vstv %s77
    %v79 = vmul.f32 %v78, %v38
    %v80 = vadd.f32 %v76, %v79
    %s81 = sld [smem:[#allocation3 + $0xb]]
    %v82 = vstv %s81
    %v83 = vadd.f32 %v80, %v82
    %s84 = scalar_lea.vmem [#allocation7], 8
    %85 = vst [vmem:[%s84] sm:$0xf] %v83
    // Predicated region
    $region10: #{tpu_custom_call.1} parent=1 // pred_check
      _
    $region11: #{tpu_custom_call.1} parent=1 // pred_check_branch
      %87 = sbr.rel (0) target = $region13
    $region12: #{tpu_custom_call.1} parent=1 // pred_region
      %89 = vsyncadd [#allocation6], 0
      %s90 = sshll.u32 [#allocation7], 4
      %s91 = int_to_ptr.vmem [resolvable:$true] %s90
      %s92 = sshll.u32 %s2, 4
      %s93 = int_to_ptr.hbm [resolvable:$true] %s92
      %98 = dma.vmem_to_hbm [thread:$0]  %s91, 192, %s93, [#allocation6], 64, 64, 4
    $region13: #{tpu_custom_call.1} parent=1 // pred_fallthru
      _
    // Predicated region
    $region14: #{tpu_custom_call.1} parent=1 // pred_check
      _
    $region15: #{tpu_custom_call.1} parent=1 // pred_check_branch
      %100 = sbr.rel (0) target = $region17
    $region16: #{tpu_custom_call.1} parent=1 // pred_region
      %102 = dma.done [#allocation6], 192
    $region17: #{tpu_custom_call.1} parent=1 // pred_fallthru
      _
    %103 = vsyncpa [#allocation5], 1
    %104 = vsyncpa [#allocation6], 1

</llo_original>
